<compile_context>
chip_gen: v6e
topology: v6e:2x2x1
jax: 0.10.0
libtpu: 0.0.40
codegen_flags: <defaults>
</compile_context>

<pallas_src>
import jax
import jax.numpy as jnp
from jax.experimental import pallas as pl
from jax.experimental.pallas import tpu as pltpu

LANES = 128
TR_MAX = 1024  # rows per tile: 1024*128*4 B = 512 KiB per input tile


def _round_up(a, b):
    return ((a + b - 1) // b) * b


def _cdiv(a, b):
    return (a + b - 1) // b


def _make_kernel(hidden):
    def kernel(w1_ref, b1_ref, w2_ref, b2_ref, x_ref, o_ref):
        # w1_ref, b1_ref, w2_ref : SMEM (hidden,) f32
        # b2_ref                 : SMEM (1,) f32
        # x_ref, o_ref           : VMEM (TR, 128) f32   (batch on lanes)
        x = x_ref[...]
        acc = jnp.maximum(x * w1_ref[0] + b1_ref[0], 0.0) * w2_ref[0]
        for k in range(1, hidden):  # hidden is static -> unrolled FMA/select chain
            acc = acc + jnp.maximum(x * w1_ref[k] + b1_ref[k], 0.0) * w2_ref[k]
        o_ref[...] = (acc + b2_ref[0]).astype(o_ref.dtype)

    return kernel


def red_neuronal_forward(x, w1, b1, w2, b2):
    """x: (N, 1) f32; w1: (1, H); b1: (1, H); w2: (H, 1); b2: (1, 1)."""
    n = x.shape[0]
    hidden = w1.shape[1]

    # --- batch tiling: (rows_pad, 128) slab, (TR, 128) tiles -------------
    rows = max(_cdiv(max(n, 1), LANES), 1)
    if rows <= TR_MAX:
        tr = rows                      # single step; block == full array on rows
        rows_pad = rows
    else:
        tr = TR_MAX                    # multiple of 8 -> valid sublane tiling
        rows_pad = _round_up(rows, tr)
    n_pad = rows_pad * LANES
    grid = (rows_pad // tr,)

    # --- wrapper-side layout plumbing (tail-only pad, then reshape) ------
    xf = x.reshape(-1).astype(jnp.float32)
    if n_pad != n:
        xf = jnp.pad(xf, (0, n_pad - n))
    x2d = xf.reshape(rows_pad, LANES)

    # weights/biases as flat SMEM scalars
    w1_s = w1.reshape(-1).astype(jnp.float32)   # (H,)
    b1_s = b1.reshape(-1).astype(jnp.float32)   # (H,)
    w2_s = w2.reshape(-1).astype(jnp.float32)   # (H,)
    b2_s = b2.reshape(-1).astype(jnp.float32)   # (1,)

    smem = pltpu.MemorySpace.SMEM
    out2d = pl.pallas_call(
        _make_kernel(hidden),
        out_shape=jax.ShapeDtypeStruct((rows_pad, LANES), jnp.float32),
        grid=grid,
        in_specs=[
            pl.BlockSpec(memory_space=smem),                 # w1 (H,)
            pl.BlockSpec(memory_space=smem),                 # b1 (H,)
            pl.BlockSpec(memory_space=smem),                 # w2 (H,)
            pl.BlockSpec(memory_space=smem),                 # b2 (1,)
            pl.BlockSpec((tr, LANES), lambda i: (i, 0)),     # x tile
        ],
        out_specs=pl.BlockSpec((tr, LANES), lambda i: (i, 0)),
        compiler_params=pltpu.CompilerParams(
            dimension_semantics=("parallel",)),
        cost_estimate=pl.CostEstimate(
            flops=(3 * hidden + 2) * n_pad,
            transcendentals=0,
            bytes_accessed=8 * n_pad),
    )(w1_s, b1_s, w2_s, b2_s, x2d)

    return out2d.reshape(-1)[:n].reshape(n, 1)


def init_params(key, neuronas_ocultas):
    """Deterministic init matching nn.Linear shapes (uniform, torch-style bounds)."""
    k1, k2, k3, k4 = jax.random.split(key, 4)
    bound1 = 1.0  # fan_in = 1
    bound2 = 1.0 / jnp.sqrt(float(neuronas_ocultas))
    # stored as (in, out) so the reference computes x @ w directly
    w1 = jax.random.uniform(k1, (1, neuronas_ocultas), jnp.float32, -bound1, bound1)
    b1 = jax.random.uniform(k2, (1, neuronas_ocultas), jnp.float32, -bound1, bound1)
    w2 = jax.random.uniform(k3, (neuronas_ocultas, 1), jnp.float32, -bound2, bound2)
    b2 = jax.random.uniform(k4, (1, 1), jnp.float32, -bound2, bound2)
    return w1, b1, w2, b2


if __name__ == "__main__":
    key = jax.random.PRNGKey(0)
    kx, kx2, kp = jax.random.split(key, 3)

    neuronas_ocultas = 5   # streamlit slider default
    batch = 8              # e.g. 8 "dia" values

    w1, b1, w2, b2 = init_params(kp, neuronas_ocultas)

    # small demo batch
    x = jax.random.uniform(kx, (batch, 1), jnp.float32, 1.0, 30.0)
    out = red_neuronal_forward(x, w1, b1, w2, b2)
    jax.block_until_ready(out)
    ref = jnp.maximum(x @ w1 + b1, 0.0) @ w2 + b2
    assert out.shape == (batch, 1)
    assert jnp.allclose(out, ref, atol=1e-5, rtol=1e-5)

    # non-multiple-of-128 batch exercises the tail padding path
    x2 = jax.random.uniform(kx2, (300, 1), jnp.float32, 1.0, 30.0)
    out2 = red_neuronal_forward(x2, w1, b1, w2, b2)
    jax.block_until_ready(out2)
    ref2 = jnp.maximum(x2 @ w1 + b1, 0.0) @ w2 + b2
    assert out2.shape == (300, 1)
    assert jnp.allclose(out2, ref2, atol=1e-5, rtol=1e-5)

    print("KERNEL_OK")
</pallas_src>

<mosaic_0001>
module attributes {stable_mosaic.version = 11 : i64} {
  func.func @kernel(%arg0: i32, %arg1: memref<5xf32, #tpu.memory_space<smem>>, %arg2: memref<5xf32, #tpu.memory_space<smem>>, %arg3: memref<5xf32, #tpu.memory_space<smem>>, %arg4: memref<1xf32, #tpu.memory_space<smem>>, %arg5: memref<1x128xf32, #tpu.memory_space<vmem>>, %arg6: memref<1x128xf32, #tpu.memory_space<vmem>>) attributes {dimension_semantics = [#tpu.dimension_semantics<parallel>], iteration_bounds = array<i64: 1>, scalar_prefetch = 0 : i64, scratch_operands = 0 : i64, tpu.core_type = #tpu.core_type<tc>, window_params = [{transform_indices = @transform_0, window_bounds = array<i64: 5>}, {transform_indices = @transform_1, window_bounds = array<i64: 5>}, {transform_indices = @transform_2, window_bounds = array<i64: 5>}, {transform_indices = @transform_3, window_bounds = array<i64: 1>}, {transform_indices = @transform_4, window_bounds = array<i64: 1, 128>}, {transform_indices = @transform_5, window_bounds = array<i64: 1, 128>}]} {
    %c0 = arith.constant 0 : index
    %c0_0 = arith.constant 0 : index
    %0 = vector.load %arg5[%c0, %c0_0] : memref<1x128xf32, #tpu.memory_space<vmem>>, vector<1x128xf32>
    %c0_1 = arith.constant 0 : index
    %1 = memref.load %arg1[%c0_1] : memref<5xf32, #tpu.memory_space<smem>>
    %2 = vector.broadcast %1 : f32 to vector<1x128xf32>
    %3 = arith.mulf %0, %2 : vector<1x128xf32>
    %c0_2 = arith.constant 0 : index
    %4 = memref.load %arg2[%c0_2] : memref<5xf32, #tpu.memory_space<smem>>
    %5 = vector.broadcast %4 : f32 to vector<1x128xf32>
    %6 = arith.addf %3, %5 : vector<1x128xf32>
    %cst = arith.constant 0.000000e+00 : f32
    %7 = vector.broadcast %cst : f32 to vector<1x128xf32>
    %8 = arith.maximumf %6, %7 : vector<1x128xf32>
    %c0_3 = arith.constant 0 : index
    %9 = memref.load %arg3[%c0_3] : memref<5xf32, #tpu.memory_space<smem>>
    %10 = vector.broadcast %9 : f32 to vector<1x128xf32>
    %11 = arith.mulf %8, %10 : vector<1x128xf32>
    %c1 = arith.constant 1 : index
    %12 = memref.load %arg1[%c1] : memref<5xf32, #tpu.memory_space<smem>>
    %13 = vector.broadcast %12 : f32 to vector<1x128xf32>
    %14 = arith.mulf %0, %13 : vector<1x128xf32>
    %c1_4 = arith.constant 1 : index
    %15 = memref.load %arg2[%c1_4] : memref<5xf32, #tpu.memory_space<smem>>
    %16 = vector.broadcast %15 : f32 to vector<1x128xf32>
    %17 = arith.addf %14, %16 : vector<1x128xf32>
    %cst_5 = arith.constant 0.000000e+00 : f32
    %18 = vector.broadcast %cst_5 : f32 to vector<1x128xf32>
    %19 = arith.maximumf %17, %18 : vector<1x128xf32>
    %c1_6 = arith.constant 1 : index
    %20 = memref.load %arg3[%c1_6] : memref<5xf32, #tpu.memory_space<smem>>
    %21 = vector.broadcast %20 : f32 to vector<1x128xf32>
    %22 = arith.mulf %19, %21 : vector<1x128xf32>
    %23 = arith.addf %11, %22 : vector<1x128xf32>
    %c2 = arith.constant 2 : index
    %24 = memref.load %arg1[%c2] : memref<5xf32, #tpu.memory_space<smem>>
    %25 = vector.broadcast %24 : f32 to vector<1x128xf32>
    %26 = arith.mulf %0, %25 : vector<1x128xf32>
    %c2_7 = arith.constant 2 : index
    %27 = memref.load %arg2[%c2_7] : memref<5xf32, #tpu.memory_space<smem>>
    %28 = vector.broadcast %27 : f32 to vector<1x128xf32>
    %29 = arith.addf %26, %28 : vector<1x128xf32>
    %cst_8 = arith.constant 0.000000e+00 : f32
    %30 = vector.broadcast %cst_8 : f32 to vector<1x128xf32>
    %31 = arith.maximumf %29, %30 : vector<1x128xf32>
    %c2_9 = arith.constant 2 : index
    %32 = memref.load %arg3[%c2_9] : memref<5xf32, #tpu.memory_space<smem>>
    %33 = vector.broadcast %32 : f32 to vector<1x128xf32>
    %34 = arith.mulf %31, %33 : vector<1x128xf32>
    %35 = arith.addf %23, %34 : vector<1x128xf32>
    %c3 = arith.constant 3 : index
    %36 = memref.load %arg1[%c3] : memref<5xf32, #tpu.memory_space<smem>>
    %37 = vector.broadcast %36 : f32 to vector<1x128xf32>
    %38 = arith.mulf %0, %37 : vector<1x128xf32>
    %c3_10 = arith.constant 3 : index
    %39 = memref.load %arg2[%c3_10] : memref<5xf32, #tpu.memory_space<smem>>
    %40 = vector.broadcast %39 : f32 to vector<1x128xf32>
    %41 = arith.addf %38, %40 : vector<1x128xf32>
    %cst_11 = arith.constant 0.000000e+00 : f32
    %42 = vector.broadcast %cst_11 : f32 to vector<1x128xf32>
    %43 = arith.maximumf %41, %42 : vector<1x128xf32>
    %c3_12 = arith.constant 3 : index
    %44 = memref.load %arg3[%c3_12] : memref<5xf32, #tpu.memory_space<smem>>
    %45 = vector.broadcast %44 : f32 to vector<1x128xf32>
    %46 = arith.mulf %43, %45 : vector<1x128xf32>
    %47 = arith.addf %35, %46 : vector<1x128xf32>
    %c4 = arith.constant 4 : index
    %48 = memref.load %arg1[%c4] : memref<5xf32, #tpu.memory_space<smem>>
    %49 = vector.broadcast %48 : f32 to vector<1x128xf32>
    %50 = arith.mulf %0, %49 : vector<1x128xf32>
    %c4_13 = arith.constant 4 : index
    %51 = memref.load %arg2[%c4_13] : memref<5xf32, #tpu.memory_space<smem>>
    %52 = vector.broadcast %51 : f32 to vector<1x128xf32>
    %53 = arith.addf %50, %52 : vector<1x128xf32>
    %cst_14 = arith.constant 0.000000e+00 : f32
    %54 = vector.broadcast %cst_14 : f32 to vector<1x128xf32>
    %55 = arith.maximumf %53, %54 : vector<1x128xf32>
    %c4_15 = arith.constant 4 : index
    %56 = memref.load %arg3[%c4_15] : memref<5xf32, #tpu.memory_space<smem>>
    %57 = vector.broadcast %56 : f32 to vector<1x128xf32>
    %58 = arith.mulf %55, %57 : vector<1x128xf32>
    %59 = arith.addf %47, %58 : vector<1x128xf32>
    %c0_16 = arith.constant 0 : index
    %60 = memref.load %arg4[%c0_16] : memref<1xf32, #tpu.memory_space<smem>>
    %61 = vector.broadcast %60 : f32 to vector<1x128xf32>
    %62 = arith.addf %59, %61 : vector<1x128xf32>
    %c0_17 = arith.constant 0 : index
    %c0_18 = arith.constant 0 : index
    %63 = vector.load %arg6[%c0_17, %c0_18] : memref<1x128xf32, #tpu.memory_space<vmem>>, vector<1x128xf32>
    tpu.vector_store %arg6[%c0_17, %c0_18], %62 {strides = array<i32>} : memref<1x128xf32, #tpu.memory_space<vmem>>, vector<1x128xf32>,
    return
  }
  func.func @transform_0(%arg0: i32) -> i32 {
    %c0_i32 = arith.constant 0 : i32
    %c0_i32_0 = arith.constant 0 : i32
    return %c0_i32 : i32
  }
  func.func @transform_1(%arg0: i32) -> i32 {
    %c0_i32 = arith.constant 0 : i32
    %c0_i32_0 = arith.constant 0 : i32
    return %c0_i32 : i32
  }
  func.func @transform_2(%arg0: i32) -> i32 {
    %c0_i32 = arith.constant 0 : i32
    %c0_i32_0 = arith.constant 0 : i32
    return %c0_i32 : i32
  }
  func.func @transform_3(%arg0: i32) -> i32 {
    %c0_i32 = arith.constant 0 : i32
    %c0_i32_0 = arith.constant 0 : i32
    return %c0_i32 : i32
  }
  func.func @transform_4(%arg0: i32) -> (i32, i32) {
    %c0_i32 = arith.constant 0 : i32
    %c0_i32_0 = arith.constant 0 : i32
    return %arg0, %c0_i32 : i32, i32
  }
  func.func @transform_5(%arg0: i32) -> (i32, i32) {
    %c0_i32 = arith.constant 0 : i32
    %c0_i32_0 = arith.constant 0 : i32
    return %arg0, %c0_i32 : i32, i32
  }
}

</mosaic_0001>

<llo_original>
// kernel: tpu_custom_call.1
$region0: #{tpu_custom_call.1}
  #allocation0 [shape = 'u32[]', space=smem, size = 0x4, offset = 0x4, fixed_abs, tag = 'smem constant byte address 0x4 - core index']
  #allocation1 [shape = 'u32[144,128]{1,0:T(1,128)}', space=vmem, size = 0x12000, scoped, tag = 'internal scratch']
  #allocation2 [shape = 'f32[1]{0:T(128)S(6)}', space=smem, size = 0x200, scoped, tag = 'scoped memory for tpu_custom_call.1']
  %s0 = inlined_call_operand.vmem [shape: f32[5], index: 0, kind: input, shape index: {}]
  %s1 = inlined_call_operand.vmem [shape: f32[5], index: 1, kind: input, shape index: {}]
  %s2 = inlined_call_operand.vmem [shape: f32[5], index: 2, kind: input, shape index: {}]
  %s3 = inlined_call_operand.<no memory space> [shape: f32[1], index: 3, kind: input, shape index: {}]
  %s4 = inlined_call_operand.vmem [shape: f32[1,128], index: 4, kind: input, shape index: {}]
  %s5 = inlined_call_operand.hbm [shape: f32[1,128], index: 5, kind: output, shape index: {}]
  %s6 = sld [smem:[#allocation0]]
  $region42: #{tpu_custom_call.1} parent=0
    _
  %s8 = ssub.s32 1, %s6
  %s9 = scalar_select 0, %s8, %s6
  %10 = sst [smem:[#allocation2]] %s3
  $region1: #{tpu_custom_call.1} parent=0
    #allocation3 [shape = 'u8[512]{0}', space=smem, size = 0x200, scoped, tag = 'input window, operand 0, single buffered']
    #allocation4 [shape = 's32[1]{0}', space=sflag, size = 0x4, scoped, tag = 'scoped memory for tpu_custom_call.1']
    #allocation5 [shape = 's32[1]{0}', space=sflag, size = 0x4, scoped, tag = 'scoped memory for tpu_custom_call.1']
    #allocation6 [shape = 'u8[512]{0}', space=smem, size = 0x200, scoped, tag = 'input window, operand 1, single buffered']
    #allocation7 [shape = 's32[1]{0}', space=sflag, size = 0x4, scoped, tag = 'scoped memory for tpu_custom_call.1']
    #allocation8 [shape = 'u8[512]{0}', space=smem, size = 0x200, scoped, tag = 'input window, operand 2, single buffered']
    #allocation9 [shape = 'u8[512]{0}', space=vmem, size = 0x400, scoped, tag = 'output window, operand 0, single buffered']
    %11 = vsyncpa [#allocation5], 0
    %12 = vsyncpa [#allocation7], 0
    %13 = vsyncpa [#allocation4], 0
    // Predicated region
    $region2: #{tpu_custom_call.1} parent=1 // pred_check
      _
    $region3: #{tpu_custom_call.1} parent=1 // pred_check_branch
      %15 = sbr.rel (0) target = $region5
    $region4: #{tpu_custom_call.1} parent=1 // pred_region
      %s17 = ssub.s32 16, 16
      %18 = vsyncadd [#allocation5], %s17
      %s20 = sshll.u32 %s0, 4
      %s21 = int_to_ptr.vmem [resolvable:$true] %s20
      %23 = dma.vmem_to_smem %s21, 16, [#allocation3], [#allocation5]
    $region5: #{tpu_custom_call.1} parent=1 // pred_fallthru
      _
    // Predicated region
    $region6: #{tpu_custom_call.1} parent=1 // pred_check
      _
    $region7: #{tpu_custom_call.1} parent=1 // pred_check_branch
      %25 = sbr.rel (0) target = $region9
    $region8: #{tpu_custom_call.1} parent=1 // pred_region
      %s27 = ssub.s32 16, 16
      %28 = vsyncadd [#allocation7], %s27
      %s30 = sshll.u32 %s1, 4
      %s31 = int_to_ptr.vmem [resolvable:$true] %s30
      %33 = dma.vmem_to_smem %s31, 16, [#allocation6], [#allocation7]
    $region9: #{tpu_custom_call.1} parent=1 // pred_fallthru
      _
    // Predicated region
    $region10: #{tpu_custom_call.1} parent=1 // pred_check
      _
    $region11: #{tpu_custom_call.1} parent=1 // pred_check_branch
      %35 = sbr.rel (0) target = $region13
    $region12: #{tpu_custom_call.1} parent=1 // pred_region
      %s37 = ssub.s32 16, 16
      %38 = vsyncadd [#allocation7], %s37
      %s40 = sshll.u32 %s2, 4
      %s41 = int_to_ptr.vmem [resolvable:$true] %s40
      %43 = dma.vmem_to_smem %s41, 16, [#allocation8], [#allocation7]
    $region13: #{tpu_custom_call.1} parent=1 // pred_fallthru
      _
    // Predicated region
    $region14: #{tpu_custom_call.1} parent=1 // pred_check
      _
    $region15: #{tpu_custom_call.1} parent=1 // pred_check_branch
      %45 = sbr.rel (0) target = $region17
    $region16: #{tpu_custom_call.1} parent=1 // pred_region
      _
    $region17: #{tpu_custom_call.1} parent=1 // pred_fallthru
      _
    // Predicated region
    $region18: #{tpu_custom_call.1} parent=1 // pred_check
      _
    $region19: #{tpu_custom_call.1} parent=1 // pred_check_branch
      %47 = sbr.rel (0) target = $region21
    $region20: #{tpu_custom_call.1} parent=1 // pred_region
      _
    $region21: #{tpu_custom_call.1} parent=1 // pred_fallthru
      _
    // Predicated region
    $region22: #{tpu_custom_call.1} parent=1 // pred_check
      _
    $region23: #{tpu_custom_call.1} parent=1 // pred_check_branch
      %49 = sbr.rel (0) target = $region25
    $region24: #{tpu_custom_call.1} parent=1 // pred_region
      %50 = dma.done [#allocation5], 16
    $region25: #{tpu_custom_call.1} parent=1 // pred_fallthru
      _
    // Predicated region
    $region26: #{tpu_custom_call.1} parent=1 // pred_check
      _
    $region27: #{tpu_custom_call.1} parent=1 // pred_check_branch
      %52 = sbr.rel (0) target = $region29
    $region28: #{tpu_custom_call.1} parent=1 // pred_region
      %53 = dma.done [#allocation7], 16
    $region29: #{tpu_custom_call.1} parent=1 // pred_fallthru
      _
    // Predicated region
    $region30: #{tpu_custom_call.1} parent=1 // pred_check
      _
    $region31: #{tpu_custom_call.1} parent=1 // pred_check_branch
      %55 = sbr.rel (0) target = $region33
    $region32: #{tpu_custom_call.1} parent=1 // pred_region
      %56 = dma.done [#allocation7], 16
    $region33: #{tpu_custom_call.1} parent=1 // pred_fallthru
      _
    %57 = sfence
    %v58 = vld [vmem:[%s4] sm:$0x1]
    %s59 = sld [smem:[#allocation3]]
    %v60 = vstv %s59
    %v61 = vmul.f32 %v58, %v60
    %s62 = sld [smem:[#allocation6]]
    %v63 = vstv %s62
    %v64 = vadd.f32 %v61, %v63
    %v65 = vmax.f32 %v64, 0.0
    %s66 = sld [smem:[#allocation8]]
    %v67 = vstv %s66
    %v68 = vmul.f32 %v65, %v67
    %s69 = sld [smem:[#allocation3 + $0x1]]
    %v70 = vstv %s69
    %v71 = vmul.f32 %v58, %v70
    %s72 = sld [smem:[#allocation6 + $0x1]]
    %v73 = vstv %s72
    %v74 = vadd.f32 %v71, %v73
    %v75 = vmax.f32 %v74, 0.0
    %s76 = sld [smem:[#allocation8 + $0x1]]
    %v77 = vstv %s76
    %v78 = vmul.f32 %v75, %v77
    %v79 = vadd.f32 %v68, %v78
    %s80 = sld [smem:[#allocation3 + $0x2]]
    %v81 = vstv %s80
    %v82 = vmul.f32 %v58, %v81
    %s83 = sld [smem:[#allocation6 + $0x2]]
    %v84 = vstv %s83
    %v85 = vadd.f32 %v82, %v84
    %v86 = vmax.f32 %v85, 0.0
    %s87 = sld [smem:[#allocation8 + $0x2]]
    %v88 = vstv %s87
    %v89 = vmul.f32 %v86, %v88
    %v90 = vadd.f32 %v79, %v89
    %s91 = sld [smem:[#allocation3 + $0x3]]
    %v92 = vstv %s91
    %v93 = vmul.f32 %v58, %v92
    %s94 = sld [smem:[#allocation6 + $0x3]]
    %v95 = vstv %s94
    %v96 = vadd.f32 %v93, %v95
    %v97 = vmax.f32 %v96, 0.0
    %s98 = sld [smem:[#allocation8 + $0x3]]
    %v99 = vstv %s98
    %v100 = vmul.f32 %v97, %v99
    %v101 = vadd.f32 %v90, %v100
    %s102 = sld [smem:[#allocation3 + $0x4]]
    %v103 = vstv %s102
    %v104 = vmul.f32 %v58, %v103
    %s105 = sld [smem:[#allocation6 + $0x4]]
    %v106 = vstv %s105
    %v107 = vadd.f32 %v104, %v106
    %v108 = vmax.f32 %v107, 0.0
    %s109 = sld [smem:[#allocation8 + $0x4]]
    %v110 = vstv %s109
    %v111 = vmul.f32 %v108, %v110
    %v112 = vadd.f32 %v101, %v111
    %s113 = sld [smem:[#allocation2]]
    %v114 = vstv %s113
    %v115 = vadd.f32 %v112, %v114
    %116 = vst [vmem:[#allocation9] sm:$0x1] %v115
    // Predicated region
    $region34: #{tpu_custom_call.1} parent=1 // pred_check
      _
    $region35: #{tpu_custom_call.1} parent=1 // pred_check_branch
      %118 = sbr.rel (0) target = $region37
    $region36: #{tpu_custom_call.1} parent=1 // pred_region
      %s120 = ssub.s32 16, 16
      %121 = vsyncadd [#allocation4], %s120
      %s123 = sshll.u32 [#allocation9], 4
      %s124 = int_to_ptr.vmem [resolvable:$true] %s123
      %126 = dma.vmem_to_hbm [thread:$0]  %s124, 16, %s5, [#allocation4]
    $region37: #{tpu_custom_call.1} parent=1 // pred_fallthru
      _
    // Predicated region
    $region38: #{tpu_custom_call.1} parent=1 // pred_check
      _
    $region39: #{tpu_custom_call.1} parent=1 // pred_check_branch
      %128 = sbr.rel (0) target = $region41
    $region40: #{tpu_custom_call.1} parent=1 // pred_region
      %129 = dma.done [#allocation4], 16
    $region41: #{tpu_custom_call.1} parent=1 // pred_fallthru
      _
    %130 = vsyncpa [#allocation4], 1
    %131 = vsyncpa [#allocation5], 1
    %132 = vsyncpa [#allocation7], 1

</llo_original>
